<compile_context>
chip_gen: v5e
topology: v5e:2x2
jax: 0.10.0
libtpu: 0.0.40
codegen_flags: <defaults>
</compile_context>

<pallas_src>
import functools

import jax
import jax.numpy as jnp
from jax.experimental import pallas as pl
from jax.experimental.pallas import tpu as pltpu

WINDOW_SIZES = (3, 4, 5)
NEG_INF = -1e30


def _round_up(x, m):
    return (x + m - 1) // m * m


def _pad_lanes(n):
    # v6e/v7x MXUs are 256 wide; only pad past 128 when the real width needs it
    # (keeps 128 padding on v5e-sized toy shapes).
    return 128 if n <= 128 else _round_up(n, 256)


def cnn_word_kernel(emb_ref, wf_ref, mb_ref, wfc_ref, bfc_ref, out_ref,
                    *, seq_len, kmax):
    """One batch tile of the CNN1dWord forward pass.

    emb_ref: [TB, SP, E]      bf16 embedded tokens (sequence zero-padded)
    wf_ref:  [kmax*E, FP]     bf16 im2col-packed conv filter banks
    mb_ref:  [S, FP]          f32 fused conv bias + validity mask (-1e30 invalid)
    wfc_ref: [FP, OP]         bf16 fc weight (zero-padded)
    bfc_ref: [1, OP]          f32 fc bias (zero-padded)
    out_ref: [TB, OP]         f32 output (lane-dense; sliced to O outside)
    """
    emb = emb_ref[...]                                    # [TB, SP, E] bf16

    # im2col: stack the kmax shifted views along the feature axis -> K = kmax*E
    x = jnp.concatenate([emb[:, k:k + seq_len, :] for k in range(kmax)],
                        axis=-1)                          # [TB, S, kmax*E]

    # single fused valid-conv matmul for all three filter banks
    acc = jax.lax.dot_general(
        x, wf_ref[...],
        dimension_numbers=(((2,), (0,)), ((), ())),
        preferred_element_type=jnp.float32)               # [TB, S, FP] f32

    # bias + validity in one add; invalid positions become -1e30 so the max
    # ignores them, then ReLU after the pool (monotone => same as ref).
    acc = acc + mb_ref[...][None]
    pooled = jnp.max(acc, axis=1)                         # [TB, FP]
    pooled = jnp.maximum(pooled, 0.0)

    # fc (pooled is already the concatenated [3F] layout; lane-dense output)
    out = jnp.dot(pooled.astype(jnp.bfloat16), wfc_ref[...],
                  preferred_element_type=jnp.float32) + bfc_ref[...]
    out_ref[...] = out                                    # [TB, OP] f32


def pack_cnn1d_word_params(emb_table, conv_ws, conv_bs, fc_w, fc_b, *, seq_len,
                           pad_idx=0):
    """One-time weight packing (hoisted out of the per-call forward).

    emb_table: [V, E] f32       conv_ws[i]: [fs, E, F] (PyTorch [F,E,fs] transposed)
    fc_w: [3F, O]   fc_b: [O]
    Returns a dict of device arrays consumed by cnn1d_word_forward.
    """
    V, E = emb_table.shape
    F = conv_ws[0].shape[-1]
    O = fc_w.shape[-1]
    nF = len(WINDOW_SIZES) * F
    kmax = max(WINDOW_SIZES)
    S = seq_len

    FP = _pad_lanes(nF)
    OP = _pad_lanes(O)

    # bf16 embedding table; padding_idx row forced to zero (matches nn.Embedding)
    table = emb_table.astype(jnp.bfloat16).at[pad_idx].set(0)

    # im2col weight layout: rows k*E:(k+1)*E hold tap k of every bank
    wf2 = jnp.zeros((kmax * E, FP), jnp.bfloat16)
    mask_bias = jnp.full((S, FP), NEG_INF, jnp.float32)
    for i, (w, b, fs) in enumerate(zip(conv_ws, conv_bs, WINDOW_SIZES)):
        lo, hi = i * F, (i + 1) * F
        for k in range(fs):
            wf2 = wf2.at[k * E:(k + 1) * E, lo:hi].set(w[k].astype(jnp.bfloat16))
        L = max(S - fs + 1, 0)                 # valid conv length of this bank
        if L > 0:
            mask_bias = mask_bias.at[:L, lo:hi].set(
                jnp.broadcast_to(b.astype(jnp.float32), (L, F)))

    wfc = jnp.zeros((FP, OP), jnp.bfloat16).at[:nF, :O].set(fc_w.astype(jnp.bfloat16))
    bfc = jnp.zeros((1, OP), jnp.float32).at[0, :O].set(fc_b.astype(jnp.float32))

    return dict(table=table, wf=wf2, mask_bias=mask_bias, wfc=wfc, bfc=bfc,
                dims=dict(E=E, F=F, O=O, FP=FP, OP=OP, S=S, kmax=kmax))


def cnn1d_word_forward(text, params, *, tile_b=128):
    """text: [S, B] int32 token ids (same convention as the PyTorch module)."""
    d = params["dims"]
    S, B = text.shape
    assert S == d["S"], "params were packed for a different sequence length"
    E, FP, OP, kmax = d["E"], d["FP"], d["OP"], d["kmax"]

    # --- batch tiling: big tiles, but keep >=2 grid steps for v7x megacore ---
    BP8 = _round_up(B, 8)
    tb = min(tile_b, BP8)
    tb = max(8, tb - tb % 8)
    if BP8 > 8 and BP8 // tb < 2:
        tb = _round_up(BP8 // 2, 8)
    BP = _round_up(B, tb)
    grid = (BP // tb,)

    # --- embedding gather in XLA (kernel cost independent of vocab size) ---
    tokens = text.T.astype(jnp.int32)                     # [B, S]
    emb = jnp.take(params["table"], tokens, axis=0)       # [B, S, E] bf16

    # pad sequence by kmax-1 (so every tap slice stays in-bounds) and batch to BP;
    # padded positions only ever feed masked-out conv outputs.
    SP = _round_up(S + kmax - 1, 8)
    emb = jnp.pad(emb, ((0, BP - B), (0, SP - S), (0, 0)))

    kernel = functools.partial(cnn_word_kernel, seq_len=S, kmax=kmax)

    out = pl.pallas_call(
        kernel,
        out_shape=jax.ShapeDtypeStruct((BP, OP), jnp.float32),
        grid=grid,
        in_specs=[
            pl.BlockSpec((tb, SP, E), lambda i: (i, 0, 0)),        # activations (batch-tiled)
            pl.BlockSpec((kmax * E, FP), lambda i: (0, 0)),        # im2col conv weights
            pl.BlockSpec((S, FP), lambda i: (0, 0)),               # fused bias + validity mask
            pl.BlockSpec((FP, OP), lambda i: (0, 0)),              # fc weight
            pl.BlockSpec((1, OP), lambda i: (0, 0)),               # fc bias
        ],
        out_specs=pl.BlockSpec((tb, OP), lambda i: (i, 0)),
        compiler_params=pltpu.CompilerParams(
            dimension_semantics=("parallel",),
            vmem_limit_bytes=32 * 1024 * 1024),
    )(emb, params["wf"], params["mask_bias"], params["wfc"], params["bfc"])

    return out[:B, :d["O"]]


def reference_forward(text, emb_table, conv_ws, conv_bs, fc_w, fc_b):
    """Pure-JAX f32 reference mirroring the PyTorch compute_forward (eval mode)."""
    tokens = text.T
    emb = emb_table[tokens].astype(jnp.float32)           # [B, S, E]
    pooled = []
    for w, b, fs in zip(conv_ws, conv_bs, WINDOW_SIZES):
        L = emb.shape[1] - fs + 1
        acc = sum(jnp.einsum("ble,ef->blf", emb[:, k:k + L, :], w[k]) for k in range(fs))
        acc = jnp.maximum(acc + b[None, None, :], 0.0)
        pooled.append(jnp.max(acc, axis=1))
    cat = jnp.concatenate(pooled, axis=-1)
    return cat @ fc_w + fc_b[None, :]


if __name__ == "__main__":
    # Small, module-consistent shapes (batch chosen so the grid has 2 tiles).
    vocab_size, pad_idx = 50, 0
    E, F_, O = 32, 16, 8        # embedding_dim, cnn_filter_num, output_dim
    S, B = 16, 16               # seq_len, batch

    key = jax.random.PRNGKey(0)
    keys = jax.random.split(key, 10)

    emb_table = jax.random.normal(keys[0], (vocab_size, E), jnp.float32) * 0.1
    emb_table = emb_table.at[pad_idx].set(0.0)            # padding_idx row is zero

    conv_ws, conv_bs = [], []
    for i, fs in enumerate(WINDOW_SIZES):
        w_torch = jax.random.normal(keys[1 + i], (F_, E, fs), jnp.float32) * 0.05  # [F, E, fs]
        conv_ws.append(jnp.transpose(w_torch, (2, 1, 0)))                           # -> [fs, E, F]
        conv_bs.append(jax.random.normal(keys[4 + i], (F_,), jnp.float32) * 0.05)

    fc_w_torch = jax.random.normal(keys[7], (O, len(WINDOW_SIZES) * F_), jnp.float32) * 0.05
    fc_w = fc_w_torch.T                                                              # [3F, O]
    fc_b = jax.random.normal(keys[8], (O,), jnp.float32) * 0.05

    # Input: [seq_len, batch] integer token ids, as the PyTorch module expects.
    text = jax.random.randint(keys[9], (S, B), 0, vocab_size, dtype=jnp.int32)

    # one-time weight packing (not part of the per-call forward cost)
    params = pack_cnn1d_word_params(emb_table, conv_ws, conv_bs, fc_w, fc_b,
                                    seq_len=S, pad_idx=pad_idx)

    out = cnn1d_word_forward(text, params, tile_b=128)
    out = jax.block_until_ready(out)

    ref = reference_forward(text, emb_table, conv_ws, conv_bs, fc_w, fc_b)
    assert out.shape == (B, O)
    # Kernel uses bf16 matmul inputs with f32 accumulation -> relaxed tolerance.
    assert jnp.allclose(out, ref, atol=1e-2, rtol=1e-2), \
        "Pallas output mismatch vs JAX reference"

    print("KERNEL_OK")
</pallas_src>

<mosaic_0001>
module attributes {stable_mosaic.version = 11 : i64} {
  func.func @cnn_word_kernel(%arg0: i32, %arg1: memref<8x24x32xbf16, #tpu.memory_space<vmem>>, %arg2: memref<160x128xbf16, #tpu.memory_space<vmem>>, %arg3: memref<16x128xf32, #tpu.memory_space<vmem>>, %arg4: memref<128x128xbf16, #tpu.memory_space<vmem>>, %arg5: memref<1x128xf32, #tpu.memory_space<vmem>>, %arg6: memref<8x128xf32, #tpu.memory_space<vmem>>) attributes {dimension_semantics = [#tpu.dimension_semantics<parallel>], iteration_bounds = array<i64: 2>, scalar_prefetch = 0 : i64, scratch_operands = 0 : i64, tpu.core_type = #tpu.core_type<tc>, window_params = [{transform_indices = @transform_0, window_bounds = array<i64: 8, 24, 32>}, {pipeline_mode = #tpu.pipeline_mode<synchronous>, transform_indices = @transform_1, window_bounds = array<i64: 160, 128>}, {pipeline_mode = #tpu.pipeline_mode<synchronous>, transform_indices = @transform_2, window_bounds = array<i64: 16, 128>}, {pipeline_mode = #tpu.pipeline_mode<synchronous>, transform_indices = @transform_3, window_bounds = array<i64: 128, 128>}, {pipeline_mode = #tpu.pipeline_mode<synchronous>, transform_indices = @transform_4, window_bounds = array<i64: 1, 128>}, {transform_indices = @transform_5, window_bounds = array<i64: 8, 128>}]} {
    %c0 = arith.constant 0 : index
    %c0_0 = arith.constant 0 : index
    %c0_1 = arith.constant 0 : index
    %0 = vector.load %arg1[%c0, %c0_0, %c0_1] : memref<8x24x32xbf16, #tpu.memory_space<vmem>>, vector<8x24x32xbf16>
    %1 = vector.extract_strided_slice %0 {offsets = [0, 0, 0], sizes = [8, 16, 32], strides = [1, 1, 1]} : vector<8x24x32xbf16> to vector<8x16x32xbf16>
    %2 = vector.extract_strided_slice %0 {offsets = [0, 1, 0], sizes = [8, 16, 32], strides = [1, 1, 1]} : vector<8x24x32xbf16> to vector<8x16x32xbf16>
    %3 = vector.extract_strided_slice %0 {offsets = [0, 2, 0], sizes = [8, 16, 32], strides = [1, 1, 1]} : vector<8x24x32xbf16> to vector<8x16x32xbf16>
    %4 = vector.extract_strided_slice %0 {offsets = [0, 3, 0], sizes = [8, 16, 32], strides = [1, 1, 1]} : vector<8x24x32xbf16> to vector<8x16x32xbf16>
    %5 = vector.extract_strided_slice %0 {offsets = [0, 4, 0], sizes = [8, 16, 32], strides = [1, 1, 1]} : vector<8x24x32xbf16> to vector<8x16x32xbf16>
    %6 = tpu.concatenate %1, %2, %3, %4, %5 in 2 : vector<8x16x32xbf16>, vector<8x16x32xbf16>, vector<8x16x32xbf16>, vector<8x16x32xbf16>, vector<8x16x32xbf16> -> vector<8x16x160xbf16>
    %c0_2 = arith.constant 0 : index
    %c0_3 = arith.constant 0 : index
    %7 = vector.load %arg2[%c0_2, %c0_3] : memref<160x128xbf16, #tpu.memory_space<vmem>>, vector<160x128xbf16>
    %cst = arith.constant dense<0.000000e+00> : vector<8x16x128xf32>
    %8 = tpu.matmul %6, %7, %cst {dimension_numbers = #tpu.dot_dimension_numbers<[2], [0], [0, 1], [1], [0, 0, 0, 1, 1, 1], [], []>} : vector<8x16x160xbf16>, vector<160x128xbf16>, vector<8x16x128xf32> -> vector<8x16x128xf32>
    %c0_4 = arith.constant 0 : index
    %c0_5 = arith.constant 0 : index
    %9 = vector.load %arg3[%c0_4, %c0_5] : memref<16x128xf32, #tpu.memory_space<vmem>>, vector<16x128xf32>
    %10 = vector.shape_cast %9 : vector<16x128xf32> to vector<1x16x128xf32>
    %11 = vector.broadcast %10 : vector<1x16x128xf32> to vector<8x16x128xf32>
    %12 = arith.addf %8, %11 : vector<8x16x128xf32>
    %cst_6 = arith.constant dense<0xFF800000> : vector<8x128xf32>
    %13 = vector.multi_reduction <maximumf>, %12, %cst_6 [1] : vector<8x16x128xf32> to vector<8x128xf32>
    %cst_7 = arith.constant 0.000000e+00 : f32
    %14 = vector.broadcast %cst_7 : f32 to vector<8x128xf32>
    %15 = arith.maximumf %13, %14 : vector<8x128xf32>
    %16 = arith.truncf %15 : vector<8x128xf32> to vector<8x128xbf16>
    %c0_8 = arith.constant 0 : index
    %c0_9 = arith.constant 0 : index
    %17 = vector.load %arg4[%c0_8, %c0_9] : memref<128x128xbf16, #tpu.memory_space<vmem>>, vector<128x128xbf16>
    %cst_10 = arith.constant dense<0.000000e+00> : vector<8x128xf32>
    %18 = tpu.matmul %16, %17, %cst_10 {dimension_numbers = #tpu.dot_dimension_numbers<[1], [0], [0], [1], [0, 0, 1, 1], [], []>} : vector<8x128xbf16>, vector<128x128xbf16>, vector<8x128xf32> -> vector<8x128xf32>
    %c0_11 = arith.constant 0 : index
    %c0_12 = arith.constant 0 : index
    %19 = vector.load %arg5[%c0_11, %c0_12] : memref<1x128xf32, #tpu.memory_space<vmem>>, vector<1x128xf32>
    %20 = vector.broadcast %19 : vector<1x128xf32> to vector<8x128xf32>
    %21 = arith.addf %18, %20 : vector<8x128xf32>
    %c0_13 = arith.constant 0 : index
    %c0_14 = arith.constant 0 : index
    %22 = vector.load %arg6[%c0_13, %c0_14] : memref<8x128xf32, #tpu.memory_space<vmem>>, vector<8x128xf32>
    tpu.vector_store %arg6[%c0_13, %c0_14], %21 {strides = array<i32>} : memref<8x128xf32, #tpu.memory_space<vmem>>, vector<8x128xf32>,
    return
  }
  func.func @transform_0(%arg0: i32) -> (i32, i32, i32) {
    %c0_i32 = arith.constant 0 : i32
    %c0_i32_0 = arith.constant 0 : i32
    %c0_i32_1 = arith.constant 0 : i32
    return %arg0, %c0_i32, %c0_i32_0 : i32, i32, i32
  }
  func.func @transform_1(%arg0: i32) -> (i32, i32) {
    %c0_i32 = arith.constant 0 : i32
    %c0_i32_0 = arith.constant 0 : i32
    %c0_i32_1 = arith.constant 0 : i32
    return %c0_i32, %c0_i32_0 : i32, i32
  }
  func.func @transform_2(%arg0: i32) -> (i32, i32) {
    %c0_i32 = arith.constant 0 : i32
    %c0_i32_0 = arith.constant 0 : i32
    %c0_i32_1 = arith.constant 0 : i32
    return %c0_i32, %c0_i32_0 : i32, i32
  }
  func.func @transform_3(%arg0: i32) -> (i32, i32) {
    %c0_i32 = arith.constant 0 : i32
    %c0_i32_0 = arith.constant 0 : i32
    %c0_i32_1 = arith.constant 0 : i32
    return %c0_i32, %c0_i32_0 : i32, i32
  }
  func.func @transform_4(%arg0: i32) -> (i32, i32) {
    %c0_i32 = arith.constant 0 : i32
    %c0_i32_0 = arith.constant 0 : i32
    %c0_i32_1 = arith.constant 0 : i32
    return %c0_i32, %c0_i32_0 : i32, i32
  }
  func.func @transform_5(%arg0: i32) -> (i32, i32) {
    %c0_i32 = arith.constant 0 : i32
    %c0_i32_0 = arith.constant 0 : i32
    return %arg0, %c0_i32 : i32, i32
  }
}

</mosaic_0001>

<llo_original>
// kernel: tpu_custom_call.1
$region0: #{tpu_custom_call.1}
  #allocation0 [shape = 'u32[]', space=smem, size = 0x4, offset = 0x4, fixed_abs, tag = 'smem constant byte address 0x4 - core index']
  #allocation1 [shape = 'u32[72,128]{1,0:T(1,128)}', space=vmem, size = 0x9000, scoped, tag = 'internal scratch']
  %s0 = inlined_call_operand.hbm [shape: bf16[16,24,32], index: 0, kind: input, shape index: {}]
  %s1 = inlined_call_operand.hbm [shape: bf16[160,128], index: 1, kind: input, shape index: {}]
  %s2 = inlined_call_operand.hbm [shape: f32[16,128], index: 2, kind: input, shape index: {}]
  %s3 = inlined_call_operand.hbm [shape: bf16[128,128], index: 3, kind: input, shape index: {}]
  %s4 = inlined_call_operand.vmem [shape: f32[1,128], index: 4, kind: input, shape index: {}]
  %s5 = inlined_call_operand.hbm [shape: f32[16,128], index: 5, kind: output, shape index: {}]
  %s6 = sld [smem:[#allocation0]]
  $region69: #{tpu_custom_call.1} parent=0
    _
  %s8 = ssub.s32 1, %s6
  %s9 = scalar_select 0, %s8, %s6
  $region1: #{tpu_custom_call.1} parent=0
    #allocation2 [shape = 'u8[98304]{0}', space=vmem, size = 0x18000, scoped, tag = 'input window, operand 0']
    #allocation3 [shape = 's32[2]{0}', space=sflag, size = 0x8, scoped, tag = 'scoped memory for tpu_custom_call.1']
    #allocation4 [shape = 's32[2]{0}', space=sflag, size = 0x8, scoped, tag = 'scoped memory for tpu_custom_call.1']
    #allocation5 [shape = 'u8[40960]{0}', space=vmem, size = 0xa000, scoped, tag = 'input window, operand 1, single buffered']
    #allocation6 [shape = 's32[1]{0}', space=sflag, size = 0x4, scoped, tag = 'scoped memory for tpu_custom_call.1']
    #allocation7 [shape = 'u8[8192]{0}', space=vmem, size = 0x2000, scoped, tag = 'input window, operand 2, single buffered']
    #allocation8 [shape = 'u8[32768]{0}', space=vmem, size = 0x8000, scoped, tag = 'input window, operand 3, single buffered']
    #allocation9 [shape = 's32[1]{0}', space=sflag, size = 0x4, scoped, tag = 'scoped memory for tpu_custom_call.1']
    #allocation10 [shape = 'u8[8192]{0}', space=vmem, size = 0x2000, scoped, tag = 'output window, operand 0']
    %10 = vsyncpa [#allocation3], 0
    %s11 = scalar_lea.sflag [#allocation3], 1
    %12 = vsyncpa %s11, 0
    %13 = vsyncpa [#allocation6], 0
    %14 = vsyncpa [#allocation9], 0
    %15 = vsyncpa [#allocation4], 0
    %s16 = scalar_lea.sflag [#allocation4], 1
    %17 = vsyncpa %s16, 0
    loop: start=0, step=1, limit=4
    $region2: #{tpu_custom_call.1} parent=1 // loop_pre_header
      _
    $region3: #{tpu_custom_call.1} parent=1 // loop_header
      %s19 = sphi 0, %s23
      %p20 = scmp.ge.s32.totalorder %s19, 4
      %s29 = sphi 0, %s31
      %s32 = sphi 0, %s29
      %s33 = sphi 0, %s32
      %s49 = sphi 0, %s33
      %s53 = sphi 0, %s53
      %s55 = sphi 0, %s53
      %s56 = sphi 0, %s55
      %s70 = sphi 0, %s56
      %s74 = sphi 0, %s74
      %s76 = sphi 0, %s74
      %s77 = sphi 0, %s76
      %s91 = sphi 0, %s77
      %s95 = sphi 0, %s95
      %s97 = sphi 0, %s95
      %s98 = sphi 0, %s97
      %s112 = sphi 0, %s98
      %s116 = sphi 0, %s116
      %s118 = sphi 0, %s116
      %s119 = sphi 0, %s118
      %s133 = sphi 0, %s119
      %s139 = sphi 0, %s141
      %s142 = sphi 0, %s139
      %s143 = sphi 0, %s142
      %s159 = sphi 0, %s143
    $region4: #{tpu_custom_call.1} parent=1 // loop_header_branch
      %22 = sbr.rel (%p20) target = $region8
    $region5: #{tpu_custom_call.1} parent=1 // loop_body
      %s24 = ssub.s32 %s19, 1
      %s25 = ssub.s32 %s19, 2
      %s26 = sadd.s32 %s19, 1
      %s27 = ssub.s32 %s19, %s26
      %p28 = scmp.eq.s32.totalorder %s27, 0
      %s30 = sadd.s32 %s29, 1
      %s31 = scalar_select %p28, %s29, %s30
      %p34 = pneg %p28
      %p35 = scmp.eq.s32.totalorder %s19, 1
      %p36 = por %p34, %p35
      %p37 = scmp.ne.s32.totalorder %s29, %s32
      %p38 = scmp.eq.s32.totalorder %s19, 0
      %p39 = por %p37, %p38
      %p40 = scmp.ne.s32.totalorder %s29, %s32
      %p41 = scmp.eq.s32.totalorder %s24, 1
      %p42 = por %p40, %p41
      %p43 = scmp.ne.s32.totalorder %s32, %s33
      %p44 = scmp.eq.s32.totalorder %s24, 0
      %p45 = por %p43, %p44
      %p46 = scmp.ne.s32.totalorder %s32, %s33
      %p47 = scmp.eq.s32.totalorder %s25, 1
      %p48 = por %p46, %p47
      %p50 = scmp.ne.s32.totalorder %s33, %s49
      %p51 = scmp.eq.s32.totalorder %s25, 0
      %p52 = por %p50, %p51
      %s54 = sadd.s32 %s53, 1
      %p57 = scmp.eq.s32.totalorder %s19, 1
      %p58 = scmp.ne.s32.totalorder %s53, %s55
      %p59 = scmp.eq.s32.totalorder %s19, 0
      %p60 = por %p58, %p59
      %p61 = scmp.ne.s32.totalorder %s53, %s55
      %p62 = scmp.eq.s32.totalorder %s24, 1
      %p63 = por %p61, %p62
      %p64 = scmp.ne.s32.totalorder %s55, %s56
      %p65 = scmp.eq.s32.totalorder %s24, 0
      %p66 = por %p64, %p65
      %p67 = scmp.ne.s32.totalorder %s55, %s56
      %p68 = scmp.eq.s32.totalorder %s25, 1
      %p69 = por %p67, %p68
      %p71 = scmp.ne.s32.totalorder %s56, %s70
      %p72 = scmp.eq.s32.totalorder %s25, 0
      %p73 = por %p71, %p72
      %s75 = sadd.s32 %s74, 1
      %p78 = scmp.eq.s32.totalorder %s19, 1
      %p79 = scmp.ne.s32.totalorder %s74, %s76
      %p80 = scmp.eq.s32.totalorder %s19, 0
      %p81 = por %p79, %p80
      %p82 = scmp.ne.s32.totalorder %s74, %s76
      %p83 = scmp.eq.s32.totalorder %s24, 1
      %p84 = por %p82, %p83
      %p85 = scmp.ne.s32.totalorder %s76, %s77
      %p86 = scmp.eq.s32.totalorder %s24, 0
      %p87 = por %p85, %p86
      %p88 = scmp.ne.s32.totalorder %s76, %s77
      %p89 = scmp.eq.s32.totalorder %s25, 1
      %p90 = por %p88, %p89
      %p92 = scmp.ne.s32.totalorder %s77, %s91
      %p93 = scmp.eq.s32.totalorder %s25, 0
      %p94 = por %p92, %p93
      %s96 = sadd.s32 %s95, 1
      %p99 = scmp.eq.s32.totalorder %s19, 1
      %p100 = scmp.ne.s32.totalorder %s95, %s97
      %p101 = scmp.eq.s32.totalorder %s19, 0
      %p102 = por %p100, %p101
      %p103 = scmp.ne.s32.totalorder %s95, %s97
      %p104 = scmp.eq.s32.totalorder %s24, 1
      %p105 = por %p103, %p104
      %p106 = scmp.ne.s32.totalorder %s97, %s98
      %p107 = scmp.eq.s32.totalorder %s24, 0
      %p108 = por %p106, %p107
      %p109 = scmp.ne.s32.totalorder %s97, %s98
      %p110 = scmp.eq.s32.totalorder %s25, 1
      %p111 = por %p109, %p110
      %p113 = scmp.ne.s32.totalorder %s98, %s112
      %p114 = scmp.eq.s32.totalorder %s25, 0
      %p115 = por %p113, %p114
      %s117 = sadd.s32 %s116, 1
      %p120 = scmp.eq.s32.totalorder %s19, 1
      %p121 = scmp.ne.s32.totalorder %s116, %s118
      %p122 = scmp.eq.s32.totalorder %s19, 0
      %p123 = por %p121, %p122
      %p124 = scmp.ne.s32.totalorder %s116, %s118
      %p125 = scmp.eq.s32.totalorder %s24, 1
      %p126 = por %p124, %p125
      %p127 = scmp.ne.s32.totalorder %s118, %s119
      %p128 = scmp.eq.s32.totalorder %s24, 0
      %p129 = por %p127, %p128
      %p130 = scmp.ne.s32.totalorder %s118, %s119
      %p131 = scmp.eq.s32.totalorder %s25, 1
      %p132 = por %p130, %p131
      %p134 = scmp.ne.s32.totalorder %s119, %s133
      %p135 = scmp.eq.s32.totalorder %s25, 0
      %p136 = por %p134, %p135
      %s137 = ssub.s32 %s19, %s26
      %p138 = scmp.eq.s32.totalorder %s137, 0
      %s140 = sadd.s32 %s139, 1
      %s141 = scalar_select %p138, %s139, %s140
      %p144 = pneg %p138
      %p145 = scmp.eq.s32.totalorder %s19, 1
      %p146 = por %p144, %p145
      %p147 = scmp.ne.s32.totalorder %s139, %s142
      %p148 = scmp.eq.s32.totalorder %s19, 0
      %p149 = por %p147, %p148
      %p150 = scmp.ne.s32.totalorder %s139, %s142
      %p151 = scmp.eq.s32.totalorder %s24, 1
      %p152 = por %p150, %p151
      %p153 = scmp.ne.s32.totalorder %s142, %s143
      %p154 = scmp.eq.s32.totalorder %s24, 0
      %p155 = por %p153, %p154
      %p156 = scmp.ne.s32.totalorder %s142, %s143
      %p157 = scmp.eq.s32.totalorder %s25, 1
      %p158 = por %p156, %p157
      %p160 = scmp.ne.s32.totalorder %s143, %s159
      %p161 = scmp.eq.s32.totalorder %s25, 0
      %p162 = por %p160, %p161
      %p163 = scmp.le.s32.totalorder 1, %s19
      %p164 = scmp.lt.s32.totalorder %s19, 3
      %p165 = pnand %p163, %p164
      %p166 = pneg %p165
      // Predicated region
      $region9: #{tpu_custom_call.1} parent=5 // pred_check
        _
      $region10: #{tpu_custom_call.1} parent=5 // pred_check_branch
        %168 = sbr.rel (%p165) target = $region12
      $region11: #{tpu_custom_call.1} parent=5 // pred_region
        %s169 = ssub.s32 %s19, 1
        // Predicated region
        $region13: #{tpu_custom_call.1} parent=11 // pred_check
          %p170 = pneg %p66
        $region14: #{tpu_custom_call.1} parent=11 // pred_check_branch
          %172 = sbr.rel (%p170) target = $region16
        $region15: #{tpu_custom_call.1} parent=11 // pred_region
          %174 = vsyncadd [#allocation6], 0
          %s175 = sshll.u32 %s1, 4
          %s176 = int_to_ptr.hbm [resolvable:$true] %s175
          %s177 = sshll.u32 [#allocation5], 4
          %s178 = int_to_ptr.vmem [resolvable:$true] %s177
          %183 = dma.hbm_to_vmem [thread:$0]  %s176, 1280, %s178, [#allocation6], 64, 64, 4
        $region16: #{tpu_custom_call.1} parent=11 // pred_fallthru
          _
        // Predicated region
        $region17: #{tpu_custom_call.1} parent=11 // pred_check
          %p184 = pneg %p87
        $region18: #{tpu_custom_call.1} parent=11 // pred_check_branch
          %186 = sbr.rel (%p184) target = $region20
        $region19: #{tpu_custom_call.1} parent=11 // pred_region
          %188 = vsyncadd [#allocation6], 0
          %s189 = sshll.u32 %s2, 4
          %s190 = int_to_ptr.hbm [resolvable:$true] %s189
          %s191 = sshll.u32 [#allocation7], 4
          %s192 = int_to_ptr.vmem [resolvable:$true] %s191
          %197 = dma.hbm_to_vmem [thread:$0]  %s190, 256, %s192, [#allocation6], 128, 128, 8
        $region20: #{tpu_custom_call.1} parent=11 // pred_fallthru
          _
        // Predicated region
        $region21: #{tpu_custom_call.1} parent=11 // pred_check
          %p198 = pneg %p108
        $region22: #{tpu_custom_call.1} parent=11 // pred_check_branch
          %200 = sbr.rel (%p198) target = $region24
        $region23: #{tpu_custom_call.1} parent=11 // pred_region
          %202 = vsyncadd [#allocation9], 0
          %s203 = sshll.u32 %s3, 4
          %s204 = int_to_ptr.hbm [resolvable:$true] %s203
          %s205 = sshll.u32 [#allocation8], 4
          %s206 = int_to_ptr.vmem [resolvable:$true] %s205
          %211 = dma.hbm_to_vmem [thread:$0]  %s204, 1024, %s206, [#allocation9], 64, 64, 4
        $region24: #{tpu_custom_call.1} parent=11 // pred_fallthru
          _
        // Predicated region
        $region25: #{tpu_custom_call.1} parent=11 // pred_check
          %p212 = pneg %p129
        $region26: #{tpu_custom_call.1} parent=11 // pred_check_branch
          %214 = sbr.rel (%p212) target = $region28
        $region27: #{tpu_custom_call.1} parent=11 // pred_region
          _
        $region28: #{tpu_custom_call.1} parent=11 // pred_fallthru
          _
      $region12: #{tpu_custom_call.1} parent=5 // pred_fallthru
        _
      %p215 = scmp.lt.s32.totalorder %s19, 2
      // Predicated region
      $region29: #{tpu_custom_call.1} parent=5 // pred_check
        %p216 = pneg %p215
      $region30: #{tpu_custom_call.1} parent=5 // pred_check_branch
        %218 = sbr.rel (%p216) target = $region32
      $region31: #{tpu_custom_call.1} parent=5 // pred_region
        // Predicated region
        $region33: #{tpu_custom_call.1} parent=31 // pred_check
          %p219 = pneg %p39
        $region34: #{tpu_custom_call.1} parent=31 // pred_check_branch
          %221 = sbr.rel (%p219) target = $region36
        $region35: #{tpu_custom_call.1} parent=31 // pred_region
          %s222 = sand.u32 %s29, 1
          %s223 = scalar_lea.sflag [#allocation3], %s222
          %s224 = sand.u32 %s29, 1
          %s225 = smul.addr %s224, 96
          %s226 = scalar_lea.vmem [#allocation2], %s225
          %s227 = smul.u32 8, %s19
          %229 = vsyncadd %s223, 0
          %s230 = smul.addr %s227, 3
          %s231 = smul.addr %s230, 4
          %s232 = scalar_lea.hbm %s0, %s231
          %s233 = sshll.u32 %s232, 4
          %s234 = int_to_ptr.hbm [resolvable:$true] %s233
          %s235 = sshll.u32 %s226, 4
          %s236 = int_to_ptr.vmem [resolvable:$true] %s235
          %241 = dma.hbm_to_vmem [thread:$0]  %s234, 1536, %s236, %s223, 64, 64, 4
        $region36: #{tpu_custom_call.1} parent=31 // pred_fallthru
          _
      $region32: #{tpu_custom_call.1} parent=5 // pred_fallthru
        _
      %p242 = scmp.le.s32.totalorder 1, %s19
      %p243 = scmp.lt.s32.totalorder %s19, 3
      %p244 = pnand %p242, %p243
      %p245 = pneg %p244
      // Predicated region
      $region37: #{tpu_custom_call.1} parent=5 // pred_check
        _
      $region38: #{tpu_custom_call.1} parent=5 // pred_check_branch
        %247 = sbr.rel (%p244) target = $region40
      $region39: #{tpu_custom_call.1} parent=5 // pred_region
        %s248 = ssub.s32 %s19, 1
        %s249 = sand.u32 %s32, 1
        %s250 = scalar_lea.sflag [#allocation3], %s249
        %s251 = sand.u32 %s32, 1
        %s252 = smul.addr %s251, 96
        %s253 = scalar_lea.vmem [#allocation2], %s252
        // Predicated region
        $region41: #{tpu_custom_call.1} parent=39 // pred_check
          %p254 = pneg %p45
        $region42: #{tpu_custom_call.1} parent=39 // pred_check_branch
          %256 = sbr.rel (%p254) target = $region44
        $region43: #{tpu_custom_call.1} parent=39 // pred_region
          %258 = dma.done %s250, 1536
        $region44: #{tpu_custom_call.1} parent=39 // pred_fallthru
          _
        // Predicated region
        $region45: #{tpu_custom_call.1} parent=39 // pred_check
          %p259 = pneg %p66
        $region46: #{tpu_custom_call.1} parent=39 // pred_check_branch
          %261 = sbr.rel (%p259) target = $region48
        $region47: #{tpu_custom_call.1} parent=39 // pred_region
          %263 = dma.done [#allocation6], 1280
        $region48: #{tpu_custom_call.1} parent=39 // pred_fallthru
          _
        // Predicated region
        $region49: #{tpu_custom_call.1} parent=39 // pred_check
          %p264 = pneg %p87
        $region50: #{tpu_custom_call.1} parent=39 // pred_check_branch
          %266 = sbr.rel (%p264) target = $region52
        $region51: #{tpu_custom_call.1} parent=39 // pred_region
          %268 = dma.done [#allocation6], 256
        $region52: #{tpu_custom_call.1} parent=39 // pred_fallthru
          _
        // Predicated region
        $region53: #{tpu_custom_call.1} parent=39 // pred_check
          %p269 = pneg %p108
        $region54: #{tpu_custom_call.1} parent=39 // pred_check_branch
          %271 = sbr.rel (%p269) target = $region56
        $region55: #{tpu_custom_call.1} parent=39 // pred_region
          %273 = dma.done [#allocation9], 1024
        $region56: #{tpu_custom_call.1} parent=39 // pred_fallthru
          _
        %s274 = sand.u32 %s32, 1
        %s275 = scalar_lea.sflag [#allocation3], %s274
        %s276 = sand.u32 %s32, 1
        %s277 = smul.addr %s276, 96
        %s278 = scalar_lea.vmem [#allocation2], %s277
        %p279 = pneg %p45
        %p280 = pneg %p42
        %p281 = pneg %p66
        %p282 = pneg %p63
        %p283 = pneg %p87
        %p284 = pneg %p84
        %p285 = pneg %p108
        %p286 = pneg %p105
        %p287 = pneg %p129
        %p288 = pneg %p126
        %p289 = pneg %p155
        %p290 = pneg %p152
        %s291 = sand.u32 %s142, 1
        %s292 = scalar_lea.sflag [#allocation4], %s291
        %s293 = sand.u32 %s142, 1
        %s294 = smul.addr %s293, 8
        %s295 = scalar_lea.vmem [#allocation10], %s294
        %s296 = smul.u32 8, %s24
        %v298 = vld [vmem:[%s253] sm:$0xf]
        %v299 = vld [vmem:[%s253 + $0x4] sm:$0xf]
        %v300 = vld [vmem:[%s253 + $0x8] sm:$0xf]
        %v301 = vld [vmem:[%s253 + $0xc] sm:$0xf]
        %v302 = vld [vmem:[%s253 + $0x10] sm:$0xf]
        %v303 = vld [vmem:[%s253 + $0x14] sm:$0xf]
        %v304 = vld [vmem:[%s253 + $0x18] sm:$0xf]
        %v305 = vld [vmem:[%s253 + $0x1c] sm:$0xf]
        %v306 = vld [vmem:[%s253 + $0x20] sm:$0xf]
        %v307 = vld [vmem:[%s253 + $0x24] sm:$0xf]
        %v308 = vld [vmem:[%s253 + $0x28] sm:$0xf]
        %v309 = vld [vmem:[%s253 + $0x2c] sm:$0xf]
        %v310 = vld [vmem:[%s253 + $0x30] sm:$0xf]
        %v311 = vld [vmem:[%s253 + $0x34] sm:$0xf]
        %v312 = vld [vmem:[%s253 + $0x38] sm:$0xf]
        %v313 = vld [vmem:[%s253 + $0x3c] sm:$0xf]
        %v314 = vld [vmem:[%s253 + $0x40] sm:$0xf]
        %v315 = vld [vmem:[%s253 + $0x44] sm:$0xf]
        %v316 = vld [vmem:[%s253 + $0x48] sm:$0xf]
        %v317 = vld [vmem:[%s253 + $0x4c] sm:$0xf]
        %v318 = vld [vmem:[%s253 + $0x50] sm:$0xf]
        %v319 = vld [vmem:[%s253 + $0x54] sm:$0xf]
        %v320 = vld [vmem:[%s253 + $0x58] sm:$0xf]
        %v321 = vld [vmem:[%s253 + $0x5c] sm:$0xf]
        %v338 = vunpack.c.l.b16 %v298
        %v339 = vunpack.c.l.b16 %v299
        %v340 = vunpack.c.l.b16 %v301
        %v341 = vunpack.c.l.b16 %v302
        %v342 = vunpack.c.l.b16 %v304
        %v343 = vunpack.c.l.b16 %v305
        %v344 = vunpack.c.l.b16 %v307
        %v345 = vunpack.c.l.b16 %v308
        %v346 = vunpack.c.l.b16 %v310
        %v347 = vunpack.c.l.b16 %v311
        %v348 = vunpack.c.l.b16 %v313
        %v349 = vunpack.c.l.b16 %v314
        %v350 = vunpack.c.l.b16 %v316
        %v351 = vunpack.c.l.b16 %v317
        %v352 = vunpack.c.l.b16 %v319
        %v353 = vunpack.c.l.b16 %v320
        %v354 = vpack.c.b16 %v339, %v338
        %v355 = vpack.c.b16 %v341, %v340
        %v356 = vpack.c.b16 %v343, %v342
        %v357 = vpack.c.b16 %v345, %v344
        %v358 = vpack.c.b16 %v347, %v346
        %v359 = vpack.c.b16 %v349, %v348
        %v360 = vpack.c.b16 %v351, %v350
        %v361 = vpack.c.b16 %v353, %v352
        %v370 = vunpack.c.l.b16 %v300
        %v371 = vunpack.c.l.b16 %v303
        %v372 = vunpack.c.l.b16 %v306
        %v373 = vunpack.c.l.b16 %v309
        %v374 = vunpack.c.l.b16 %v312
        %v375 = vunpack.c.l.b16 %v315
        %v376 = vunpack.c.l.b16 %v318
        %v377 = vunpack.c.l.b16 %v321
        %v378 = vpack.c.b16 %v370, %v370
        %v379 = vpack.c.b16 %v371, %v371
        %v380 = vpack.c.b16 %v372, %v372
        %v381 = vpack.c.b16 %v373, %v373
        %v382 = vpack.c.b16 %v374, %v374
        %v383 = vpack.c.b16 %v375, %v375
        %v384 = vpack.c.b16 %v376, %v376
        %v385 = vpack.c.b16 %v377, %v377
        %vm386 = vsmask.f32 7424
        %v388 = vshrl.u32 %v354, 16
        %v390 = vshll.u32 %v354, 16
        %v392 = vrot.slane %v390, 1
        %v393 = vor.u32 %v388, %v392
        %v395 = vshll.u32 %v378, 16
        %v397 = vrot.slane %v395, 1
        %v398 = vsel %vm386, %v393, %v397
        %v400 = vshrl.u32 %v355, 16
        %v402 = vshll.u32 %v355, 16
        %v404 = vrot.slane %v402, 1
        %v405 = vor.u32 %v400, %v404
        %v407 = vshll.u32 %v379, 16
        %v409 = vrot.slane %v407, 1
        %v410 = vsel %vm386, %v405, %v409
        %v412 = vshrl.u32 %v356, 16
        %v414 = vshll.u32 %v356, 16
        %v416 = vrot.slane %v414, 1
        %v417 = vor.u32 %v412, %v416
        %v419 = vshll.u32 %v380, 16
        %v421 = vrot.slane %v419, 1
        %v422 = vsel %vm386, %v417, %v421
        %v424 = vshrl.u32 %v357, 16
        %v426 = vshll.u32 %v357, 16
        %v428 = vrot.slane %v426, 1
        %v429 = vor.u32 %v424, %v428
        %v431 = vshll.u32 %v381, 16
        %v433 = vrot.slane %v431, 1
        %v434 = vsel %vm386, %v429, %v433
        %v436 = vshrl.u32 %v358, 16
        %v438 = vshll.u32 %v358, 16
        %v440 = vrot.slane %v438, 1
        %v441 = vor.u32 %v436, %v440
        %v443 = vshll.u32 %v382, 16
        %v445 = vrot.slane %v443, 1
        %v446 = vsel %vm386, %v441, %v445
        %v448 = vshrl.u32 %v359, 16
        %v450 = vshll.u32 %v359, 16
        %v452 = vrot.slane %v450, 1
        %v453 = vor.u32 %v448, %v452
        %v455 = vshll.u32 %v383, 16
        %v457 = vrot.slane %v455, 1
        %v458 = vsel %vm386, %v453, %v457
        %v460 = vshrl.u32 %v360, 16
        %v462 = vshll.u32 %v360, 16
        %v464 = vrot.slane %v462, 1
        %v465 = vor.u32 %v460, %v464
        %v467 = vshll.u32 %v384, 16
        %v469 = vrot.slane %v467, 1
        %v470 = vsel %vm386, %v465, %v469
        %v472 = vshrl.u32 %v361, 16
        %v474 = vshll.u32 %v361, 16
        %v476 = vrot.slane %v474, 1
        %v477 = vor.u32 %v472, %v476
        %v479 = vshll.u32 %v385, 16
        %v481 = vrot.slane %v479, 1
        %v482 = vsel %vm386, %v477, %v481
        %483 = vrot.lane.b32.xlu0 %v398, 32
        %v484 = vpop.permute.xlu0 %483
        %485 = vrot.lane.b32.xlu0 %v410, 32
        %v486 = vpop.permute.xlu0 %485
        %487 = vrot.lane.b32.xlu0 %v422, 32
        %v488 = vpop.permute.xlu0 %487
        %489 = vrot.lane.b32.xlu0 %v434, 32
        %v490 = vpop.permute.xlu0 %489
        %491 = vrot.lane.b32.xlu0 %v446, 32
        %v492 = vpop.permute.xlu0 %491
        %493 = vrot.lane.b32.xlu0 %v458, 32
        %v494 = vpop.permute.xlu0 %493
        %495 = vrot.lane.b32.xlu0 %v470, 32
        %v496 = vpop.permute.xlu0 %495
        %497 = vrot.lane.b32.xlu0 %v482, 32
        %v498 = vpop.permute.xlu0 %497
        %vm499 = vcmask 1046528
        %v500 = vrot.slane %v354, 1
        %v501 = vrot.slane %v378, 1
        %v502 = vsel %vm499, %v500, %v501
        %v503 = vrot.slane %v355, 1
        %v504 = vrot.slane %v379, 1
        %v505 = vsel %vm499, %v503, %v504
        %v506 = vrot.slane %v356, 1
        %v507 = vrot.slane %v380, 1
        %v508 = vsel %vm499, %v506, %v507
        %v509 = vrot.slane %v357, 1
        %v510 = vrot.slane %v381, 1
        %v511 = vsel %vm499, %v509, %v510
        %v512 = vrot.slane %v358, 1
        %v513 = vrot.slane %v382, 1
        %v514 = vsel %vm499, %v512, %v513
        %v515 = vrot.slane %v359, 1
        %v516 = vrot.slane %v383, 1
        %v517 = vsel %vm499, %v515, %v516
        %v518 = vrot.slane %v360, 1
        %v519 = vrot.slane %v384, 1
        %v520 = vsel %vm499, %v518, %v519
        %v521 = vrot.slane %v361, 1
        %v522 = vrot.slane %v385, 1
        %v523 = vsel %vm499, %v521, %v522
        %524 = vrot.lane.b32.xlu0 %v502, 64
        %v525 = vpop.permute.xlu0 %524
        %526 = vrot.lane.b32.xlu0 %v505, 64
        %v527 = vpop.permute.xlu0 %526
        %528 = vrot.lane.b32.xlu0 %v508, 64
        %v529 = vpop.permute.xlu0 %528
        %530 = vrot.lane.b32.xlu0 %v511, 64
        %v531 = vpop.permute.xlu0 %530
        %532 = vrot.lane.b32.xlu0 %v514, 64
        %v533 = vpop.permute.xlu0 %532
        %534 = vrot.lane.b32.xlu0 %v517, 64
        %v535 = vpop.permute.xlu0 %534
        %536 = vrot.lane.b32.xlu0 %v520, 64
        %v537 = vpop.permute.xlu0 %536
        %538 = vrot.lane.b32.xlu0 %v523, 64
        %v539 = vpop.permute.xlu0 %538
        %vm540 = vsmask.f32 6400
        %v541 = vrot.slane %v388, 1
        %v542 = vrot.slane %v390, 2
        %v543 = vor.u32 %v541, %v542
        %v544 = vshrl.u32 %v378, 16
        %v546 = vrot.slane %v544, 1
        %v547 = vrot.slane %v395, 2
        %v548 = vor.u32 %v546, %v547
        %v549 = vsel %vm540, %v543, %v548
        %v550 = vrot.slane %v400, 1
        %v551 = vrot.slane %v402, 2
        %v552 = vor.u32 %v550, %v551
        %v553 = vshrl.u32 %v379, 16
        %v555 = vrot.slane %v553, 1
        %v556 = vrot.slane %v407, 2
        %v557 = vor.u32 %v555, %v556
        %v558 = vsel %vm540, %v552, %v557
        %v559 = vrot.slane %v412, 1
        %v560 = vrot.slane %v414, 2
        %v561 = vor.u32 %v559, %v560
        %v562 = vshrl.u32 %v380, 16
        %v564 = vrot.slane %v562, 1
        %v565 = vrot.slane %v419, 2
        %v566 = vor.u32 %v564, %v565
        %v567 = vsel %vm540, %v561, %v566
        %v568 = vrot.slane %v424, 1
        %v569 = vrot.slane %v426, 2
        %v570 = vor.u32 %v568, %v569
        %v571 = vshrl.u32 %v381, 16
        %v573 = vrot.slane %v571, 1
        %v574 = vrot.slane %v431, 2
        %v575 = vor.u32 %v573, %v574
        %v576 = vsel %vm540, %v570, %v575
        %v577 = vrot.slane %v436, 1
        %v578 = vrot.slane %v438, 2
        %v579 = vor.u32 %v577, %v578
        %v580 = vshrl.u32 %v382, 16
        %v582 = vrot.slane %v580, 1
        %v583 = vrot.slane %v443, 2
        %v584 = vor.u32 %v582, %v583
        %v585 = vsel %vm540, %v579, %v584
        %v586 = vrot.slane %v448, 1
        %v587 = vrot.slane %v450, 2
        %v588 = vor.u32 %v586, %v587
        %v589 = vshrl.u32 %v383, 16
        %v591 = vrot.slane %v589, 1
        %v592 = vrot.slane %v455, 2
        %v593 = vor.u32 %v591, %v592
        %v594 = vsel %vm540, %v588, %v593
        %v595 = vrot.slane %v460, 1
        %v596 = vrot.slane %v462, 2
        %v597 = vor.u32 %v595, %v596
        %v598 = vshrl.u32 %v384, 16
        %v600 = vrot.slane %v598, 1
        %v601 = vrot.slane %v467, 2
        %v602 = vor.u32 %v600, %v601
        %v603 = vsel %vm540, %v597, %v602
        %v604 = vrot.slane %v472, 1
        %v605 = vrot.slane %v474, 2
        %v606 = vor.u32 %v604, %v605
        %v607 = vshrl.u32 %v385, 16
        %v609 = vrot.slane %v607, 1
        %v610 = vrot.slane %v479, 2
        %v611 = vor.u32 %v609, %v610
        %v612 = vsel %vm540, %v606, %v611
        %613 = vrot.lane.b32.xlu0 %v549, 96
        %v614 = vpop.permute.xlu0 %613
        %615 = vrot.lane.b32.xlu0 %v558, 96
        %v616 = vpop.permute.xlu0 %615
        %617 = vrot.lane.b32.xlu0 %v567, 96
        %v618 = vpop.permute.xlu0 %617
        %619 = vrot.lane.b32.xlu0 %v576, 96
        %v620 = vpop.permute.xlu0 %619
        %621 = vrot.lane.b32.xlu0 %v585, 96
        %v622 = vpop.permute.xlu0 %621
        %623 = vrot.lane.b32.xlu0 %v594, 96
        %v624 = vpop.permute.xlu0 %623
        %625 = vrot.lane.b32.xlu0 %v603, 96
        %v626 = vpop.permute.xlu0 %625
        %627 = vrot.lane.b32.xlu0 %v612, 96
        %v628 = vpop.permute.xlu0 %627
        %vm629 = vcmask 1045504
        %v630 = vrot.slane %v354, 2
        %v631 = vrot.slane %v378, 2
        %v632 = vsel %vm629, %v630, %v631
        %v633 = vrot.slane %v355, 2
        %v634 = vrot.slane %v379, 2
        %v635 = vsel %vm629, %v633, %v634
        %v636 = vrot.slane %v356, 2
        %v637 = vrot.slane %v380, 2
        %v638 = vsel %vm629, %v636, %v637
        %v639 = vrot.slane %v357, 2
        %v640 = vrot.slane %v381, 2
        %v641 = vsel %vm629, %v639, %v640
        %v642 = vrot.slane %v358, 2
        %v643 = vrot.slane %v382, 2
        %v644 = vsel %vm629, %v642, %v643
        %v645 = vrot.slane %v359, 2
        %v646 = vrot.slane %v383, 2
        %v647 = vsel %vm629, %v645, %v646
        %v648 = vrot.slane %v360, 2
        %v649 = vrot.slane %v384, 2
        %v650 = vsel %vm629, %v648, %v649
        %v651 = vrot.slane %v361, 2
        %v652 = vrot.slane %v385, 2
        %v653 = vsel %vm629, %v651, %v652
        %vm654 = vcmask 261120
        %v656 = vsel %vm654, %v354, %v484
        %v658 = vsel %vm654, %v355, %v486
        %v660 = vsel %vm654, %v356, %v488
        %v662 = vsel %vm654, %v357, %v490
        %v664 = vsel %vm654, %v358, %v492
        %v666 = vsel %vm654, %v359, %v494
        %v668 = vsel %vm654, %v360, %v496
        %v670 = vsel %vm654, %v361, %v498
        %vm671 = vcmask 523264
        %v673 = vsel %vm671, %v656, %v525
        %v675 = vsel %vm671, %v658, %v527
        %v677 = vsel %vm671, %v660, %v529
        %v679 = vsel %vm671, %v662, %v531
        %v681 = vsel %vm671, %v664, %v533
        %v683 = vsel %vm671, %v666, %v535
        %v685 = vsel %vm671, %v668, %v537
        %v687 = vsel %vm671, %v670, %v539
        %vm688 = vcmask 785408
        %v690 = vsel %vm688, %v673, %v614
        %v693 = vsel %vm688, %v675, %v616
        %v696 = vsel %vm688, %v677, %v618
        %v699 = vsel %vm688, %v679, %v620
        %v702 = vsel %vm688, %v681, %v622
        %v705 = vsel %vm688, %v683, %v624
        %v708 = vsel %vm688, %v685, %v626
        %v711 = vsel %vm688, %v687, %v628
        %v713 = vld [vmem:[#allocation5] sm:$0xf]
        %v714 = vld [vmem:[#allocation5 + $0x4] sm:$0xf]
        %v715 = vld [vmem:[#allocation5 + $0x8] sm:$0xf]
        %v716 = vld [vmem:[#allocation5 + $0xc] sm:$0xf]
        %v717 = vld [vmem:[#allocation5 + $0x10] sm:$0xf]
        %v718 = vld [vmem:[#allocation5 + $0x14] sm:$0xf]
        %v719 = vld [vmem:[#allocation5 + $0x18] sm:$0xf]
        %v720 = vld [vmem:[#allocation5 + $0x1c] sm:$0xf]
        %v721 = vld [vmem:[#allocation5 + $0x20] sm:$0xf]
        %v722 = vld [vmem:[#allocation5 + $0x24] sm:$0xf]
        %v723 = vld [vmem:[#allocation5 + $0x28] sm:$0xf]
        %v724 = vld [vmem:[#allocation5 + $0x2c] sm:$0xf]
        %v725 = vld [vmem:[#allocation5 + $0x30] sm:$0xf]
        %v726 = vld [vmem:[#allocation5 + $0x34] sm:$0xf]
        %v727 = vld [vmem:[#allocation5 + $0x38] sm:$0xf]
        %v728 = vld [vmem:[#allocation5 + $0x3c] sm:$0xf]
        %v729 = vld [vmem:[#allocation5 + $0x40] sm:$0xf]
        %v730 = vld [vmem:[#allocation5 + $0x44] sm:$0xf]
        %v731 = vld [vmem:[#allocation5 + $0x48] sm:$0xf]
        %v732 = vld [vmem:[#allocation5 + $0x4c] sm:$0xf]
        %v733 = vld [vmem:[#allocation7] sm:$0xff]
        %v734 = vld [vmem:[#allocation7 + $0x8] sm:$0xff]
        %v755 = vunpack.c.l.b16 %v713
        %v756 = vunpack.c.l.b16 %v714
        %v757 = vunpack.c.l.b16 %v715
        %v758 = vunpack.c.l.b16 %v716
        %v759 = vunpack.c.l.b16 %v717
        %v760 = vunpack.c.l.b16 %v718
        %v761 = vunpack.c.l.b16 %v719
        %v762 = vunpack.c.l.b16 %v720
        %v763 = vunpack.c.l.b16 %v721
        %v764 = vunpack.c.l.b16 %v722
        %v765 = vunpack.c.l.b16 %v723
        %v766 = vunpack.c.l.b16 %v724
        %v767 = vunpack.c.l.b16 %v725
        %v768 = vunpack.c.l.b16 %v726
        %v769 = vunpack.c.l.b16 %v727
        %v770 = vunpack.c.l.b16 %v728
        %v771 = vunpack.c.l.b16 %v729
        %v772 = vunpack.c.l.b16 %v730
        %v773 = vunpack.c.l.b16 %v731
        %v774 = vunpack.c.l.b16 %v732
        %v775 = vpack.c.b16 %v756, %v755
        %v776 = vpack.c.b16 %v758, %v757
        %v777 = vpack.c.b16 %v760, %v759
        %v778 = vpack.c.b16 %v762, %v761
        %v779 = vpack.c.b16 %v764, %v763
        %v780 = vpack.c.b16 %v766, %v765
        %v781 = vpack.c.b16 %v768, %v767
        %v782 = vpack.c.b16 %v770, %v769
        %v783 = vpack.c.b16 %v772, %v771
        %v784 = vpack.c.b16 %v774, %v773
        %v796 = vsel %vm654, %v632, 0
        %v799 = vsel %vm654, %v635, 0
        %v802 = vsel %vm654, %v638, 0
        %v805 = vsel %vm654, %v641, 0
        %v808 = vsel %vm654, %v644, 0
        %v811 = vsel %vm654, %v647, 0
        %v814 = vsel %vm654, %v650, 0
        %v817 = vsel %vm654, %v653, 0
        %819 = vmatpush.bf16.msra.mxu0 %v782
        %820 = vmatpush.bf16.msra.mxu0 %v781
        %821 = vmatpush.bf16.msra.mxu0 %v780
        %822 = vmatpush.bf16.msra.mxu0 %v779
        %823 = vmatpush.bf16.msra.mxu0 %v778
        %824 = vmatpush.bf16.msra.mxu0 %v777
        %825 = vmatpush.bf16.msra.mxu0 %v776
        %826 = vmatpush.bf16.msra.mxu0 %v775
        %827 = vmatmul.bf16.gmra.mxu0 %v690
        %v828 = vpop.f32.mrf.mxu0
        %v829 = vadd.f32 %v733, %v828
        %v830 = vpop.f32.mrf.mxu0
        %v831 = vadd.f32 %v734, %v830
        %832 = vmatmul.bf16.gmra.mxu0 %v693
        %v833 = vpop.f32.mrf.mxu0
        %v834 = vadd.f32 %v733, %v833
        %v835 = vpop.f32.mrf.mxu0
        %v836 = vadd.f32 %v734, %v835
        %837 = vmatmul.bf16.gmra.mxu0 %v696
        %v838 = vpop.f32.mrf.mxu0
        %v839 = vadd.f32 %v733, %v838
        %v840 = vpop.f32.mrf.mxu0
        %v841 = vadd.f32 %v734, %v840
        %842 = vmatmul.bf16.gmra.mxu0 %v699
        %v843 = vpop.f32.mrf.mxu0
        %v844 = vadd.f32 %v733, %v843
        %v845 = vpop.f32.mrf.mxu0
        %v846 = vadd.f32 %v734, %v845
        %847 = vmatmul.bf16.gmra.mxu0 %v702
        %v848 = vpop.f32.mrf.mxu0
        %v849 = vadd.f32 %v733, %v848
        %v850 = vpop.f32.mrf.mxu0
        %v851 = vadd.f32 %v734, %v850
        %852 = vmatmul.bf16.gmra.mxu0 %v705
        %v853 = vpop.f32.mrf.mxu0
        %v854 = vadd.f32 %v733, %v853
        %v855 = vpop.f32.mrf.mxu0
        %v856 = vadd.f32 %v734, %v855
        %857 = vmatmul.bf16.gmra.mxu0 %v708
        %v858 = vpop.f32.mrf.mxu0
        %v859 = vadd.f32 %v733, %v858
        %v860 = vpop.f32.mrf.mxu0
        %v861 = vadd.f32 %v734, %v860
        %862 = vmatmul.bf16.gmra.mxu0 %v711
        %v863 = vpop.f32.mrf.mxu0
        %v864 = vadd.f32 %v733, %v863
        %v865 = vpop.f32.mrf.mxu0
        %v866 = vadd.f32 %v734, %v865
        %867 = vdwg.mxu0
        %868 = vmatpush.bf16.msra.mxu0 0
        %869 = vmatpush.bf16.msra.mxu0 0
        %870 = vmatpush.bf16.msra.mxu0 0
        %871 = vmatpush.bf16.msra.mxu0 0
        %872 = vmatpush.bf16.msra.mxu0 0
        %873 = vmatpush.bf16.msra.mxu0 0
        %874 = vmatpush.bf16.msra.mxu0 %v784
        %875 = vmatpush.bf16.msra.mxu0 %v783
        %876 = vmatmul.bf16.gmra.mxu0 %v796
        %v877 = vpop.f32.mrf.mxu0
        %v878 = vadd.f32 %v829, %v877
        %v879 = vpop.f32.mrf.mxu0
        %v880 = vadd.f32 %v831, %v879
        %881 = vmatmul.bf16.gmra.mxu0 %v799
        %v882 = vpop.f32.mrf.mxu0
        %v883 = vadd.f32 %v834, %v882
        %v884 = vpop.f32.mrf.mxu0
        %v885 = vadd.f32 %v836, %v884
        %886 = vmatmul.bf16.gmra.mxu0 %v802
        %v887 = vpop.f32.mrf.mxu0
        %v888 = vadd.f32 %v839, %v887
        %v889 = vpop.f32.mrf.mxu0
        %v890 = vadd.f32 %v841, %v889
        %891 = vmatmul.bf16.gmra.mxu0 %v805
        %v892 = vpop.f32.mrf.mxu0
        %v893 = vadd.f32 %v844, %v892
        %v894 = vpop.f32.mrf.mxu0
        %v895 = vadd.f32 %v846, %v894
        %896 = vmatmul.bf16.gmra.mxu0 %v808
        %v897 = vpop.f32.mrf.mxu0
        %v898 = vadd.f32 %v849, %v897
        %v899 = vpop.f32.mrf.mxu0
        %v900 = vadd.f32 %v851, %v899
        %901 = vmatmul.bf16.gmra.mxu0 %v811
        %v902 = vpop.f32.mrf.mxu0
        %v903 = vadd.f32 %v854, %v902
        %v904 = vpop.f32.mrf.mxu0
        %v905 = vadd.f32 %v856, %v904
        %906 = vmatmul.bf16.gmra.mxu0 %v814
        %v907 = vpop.f32.mrf.mxu0
        %v908 = vadd.f32 %v859, %v907
        %v909 = vpop.f32.mrf.mxu0
        %v910 = vadd.f32 %v861, %v909
        %911 = vmatmul.bf16.gmra.mxu0 %v817
        %v912 = vpop.f32.mrf.mxu0
        %v913 = vadd.f32 %v864, %v912
        %v914 = vpop.f32.mrf.mxu0
        %v915 = vadd.f32 %v866, %v914
        %916 = vdwg.mxu0
        %v917 = vmax.f32 %v878, %v880
        %v918 = vrot.slane %v917, 4
        %v919 = vmax.f32 %v917, %v918
        %v920 = vrot.slane %v919, 2
        %v921 = vmax.f32 %v919, %v920
        %v922 = vrot.slane %v921, 1
        %v923 = vmax.f32 %v921, %v922
        %v924 = vmax.f32 %v883, %v885
        %v925 = vrot.slane %v924, 4
        %v926 = vmax.f32 %v924, %v925
        %v927 = vrot.slane %v926, 2
        %v928 = vmax.f32 %v926, %v927
        %v929 = vrot.slane %v928, 1
        %v930 = vmax.f32 %v928, %v929
        %v931 = vmax.f32 %v888, %v890
        %v932 = vrot.slane %v931, 4
        %v933 = vmax.f32 %v931, %v932
        %v934 = vrot.slane %v933, 2
        %v935 = vmax.f32 %v933, %v934
        %v936 = vrot.slane %v935, 1
        %v937 = vmax.f32 %v935, %v936
        %v938 = vmax.f32 %v893, %v895
        %v939 = vrot.slane %v938, 4
        %v940 = vmax.f32 %v938, %v939
        %v941 = vrot.slane %v940, 2
        %v942 = vmax.f32 %v940, %v941
        %v943 = vrot.slane %v942, 1
        %v944 = vmax.f32 %v942, %v943
        %v945 = vmax.f32 %v898, %v900
        %v946 = vrot.slane %v945, 4
        %v947 = vmax.f32 %v945, %v946
        %v948 = vrot.slane %v947, 2
        %v949 = vmax.f32 %v947, %v948
        %v950 = vrot.slane %v949, 1
        %v951 = vmax.f32 %v949, %v950
        %v952 = vmax.f32 %v903, %v905
        %v953 = vrot.slane %v952, 4
        %v954 = vmax.f32 %v952, %v953
        %v955 = vrot.slane %v954, 2
        %v956 = vmax.f32 %v954, %v955
        %v957 = vrot.slane %v956, 1
        %v958 = vmax.f32 %v956, %v957
        %v959 = vmax.f32 %v908, %v910
        %v960 = vrot.slane %v959, 4
        %v961 = vmax.f32 %v959, %v960
        %v962 = vrot.slane %v961, 2
        %v963 = vmax.f32 %v961, %v962
        %v964 = vrot.slane %v963, 1
        %v965 = vmax.f32 %v963, %v964
        %v966 = vmax.f32 %v913, %v915
        %v967 = vrot.slane %v966, 4
        %v968 = vmax.f32 %v966, %v967
        %v969 = vrot.slane %v968, 2
        %v970 = vmax.f32 %v968, %v969
        %v971 = vrot.slane %v970, 1
        %v972 = vmax.f32 %v970, %v971
        %v973 = vmax.f32 %v923, 0.0
        %v974 = vmax.f32 %v930, 0.0
        %v975 = vmax.f32 %v937, 0.0
        %v976 = vmax.f32 %v944, 0.0
        %v977 = vmax.f32 %v951, 0.0
        %v978 = vmax.f32 %v958, 0.0
        %v979 = vmax.f32 %v965, 0.0
        %v980 = vmax.f32 %v972, 0.0
        %v981 = vpack.c.bf16 %v973, %v973
        %v982 = vpack.c.bf16 %v974, %v974
        %v983 = vpack.c.bf16 %v975, %v975
        %v984 = vpack.c.bf16 %v976, %v976
        %v985 = vpack.c.bf16 %v977, %v977
        %v986 = vpack.c.bf16 %v978, %v978
        %v987 = vpack.c.bf16 %v979, %v979
        %v988 = vpack.c.bf16 %v980, %v980
        %v989 = vld [vmem:[#allocation8] sm:$0xf]
        %v990 = vld [vmem:[#allocation8 + $0x4] sm:$0xf]
        %v991 = vld [vmem:[#allocation8 + $0x8] sm:$0xf]
        %v992 = vld [vmem:[#allocation8 + $0xc] sm:$0xf]
        %v993 = vld [vmem:[#allocation8 + $0x10] sm:$0xf]
        %v994 = vld [vmem:[#allocation8 + $0x14] sm:$0xf]
        %v995 = vld [vmem:[#allocation8 + $0x18] sm:$0xf]
        %v996 = vld [vmem:[#allocation8 + $0x1c] sm:$0xf]
        %v997 = vld [vmem:[#allocation8 + $0x20] sm:$0xf]
        %v998 = vld [vmem:[#allocation8 + $0x24] sm:$0xf]
        %v999 = vld [vmem:[#allocation8 + $0x28] sm:$0xf]
        %v1000 = vld [vmem:[#allocation8 + $0x2c] sm:$0xf]
        %v1001 = vld [vmem:[#allocation8 + $0x30] sm:$0xf]
        %v1002 = vld [vmem:[#allocation8 + $0x34] sm:$0xf]
        %v1003 = vld [vmem:[#allocation8 + $0x38] sm:$0xf]
        %v1004 = vld [vmem:[#allocation8 + $0x3c] sm:$0xf]
        %v1005 = vld [vmem:[%s4] sm:$0x1]
        %v1007 = vperm.slane %v1005, 0
        %v1017 = vunpack.c.l.b16 %v981
        %v1018 = vunpack.c.l.b16 %v982
        %v1019 = vunpack.c.l.b16 %v983
        %v1020 = vunpack.c.l.b16 %v984
        %v1021 = vunpack.c.l.b16 %v985
        %v1022 = vunpack.c.l.b16 %v986
        %v1023 = vunpack.c.l.b16 %v987
        %v1024 = vunpack.c.l.b16 %v988
        %vm1025 = vcmask 1041409
        %v1026 = vsel %vm1025, %v1018, %v1017
        %vm1027 = vcmask 1042434
        %v1028 = vsel %vm1027, %v1019, %v1026
        %vm1029 = vcmask 1043459
        %v1030 = vsel %vm1029, %v1020, %v1028
        %vm1031 = vcmask 1044484
        %v1032 = vsel %vm1031, %v1021, %v1030
        %vm1033 = vcmask 1045509
        %v1034 = vsel %vm1033, %v1022, %v1032
        %vm1035 = vcmask 1046534
        %v1036 = vsel %vm1035, %v1023, %v1034
        %vm1037 = vcmask 1047559
        %v1038 = vsel %vm1037, %v1024, %v1036
        %v1039 = vpack.c.b16 %v1038, %v1038
        %v1057 = vunpack.c.l.b16 %v989
        %v1058 = vunpack.c.l.b16 %v990
        %v1059 = vunpack.c.l.b16 %v991
        %v1060 = vunpack.c.l.b16 %v992
        %v1061 = vunpack.c.l.b16 %v993
        %v1062 = vunpack.c.l.b16 %v994
        %v1063 = vunpack.c.l.b16 %v995
        %v1064 = vunpack.c.l.b16 %v996
        %v1065 = vunpack.c.l.b16 %v997
        %v1066 = vunpack.c.l.b16 %v998
        %v1067 = vunpack.c.l.b16 %v999
        %v1068 = vunpack.c.l.b16 %v1000
        %v1069 = vunpack.c.l.b16 %v1001
        %v1070 = vunpack.c.l.b16 %v1002
        %v1071 = vunpack.c.l.b16 %v1003
        %v1072 = vunpack.c.l.b16 %v1004
        %v1073 = vpack.c.b16 %v1058, %v1057
        %v1074 = vpack.c.b16 %v1060, %v1059
        %v1075 = vpack.c.b16 %v1062, %v1061
        %v1076 = vpack.c.b16 %v1064, %v1063
        %v1077 = vpack.c.b16 %v1066, %v1065
        %v1078 = vpack.c.b16 %v1068, %v1067
        %v1079 = vpack.c.b16 %v1070, %v1069
        %v1080 = vpack.c.b16 %v1072, %v1071
        %1089 = vmatpush.bf16.msra.mxu0 %v1080
        %1090 = vmatpush.bf16.msra.mxu0 %v1079
        %1091 = vmatpush.bf16.msra.mxu0 %v1078
        %1092 = vmatpush.bf16.msra.mxu0 %v1077
        %1093 = vmatpush.bf16.msra.mxu0 %v1076
        %1094 = vmatpush.bf16.msra.mxu0 %v1075
        %1095 = vmatpush.bf16.msra.mxu0 %v1074
        %1096 = vmatpush.bf16.msra.mxu0 %v1073
        %1097 = vmatmul.bf16.gmra.mxu0 %v1039
        %v1098 = vpop.f32.mrf.mxu0
        %v1099 = vadd.f32 %v1007, %v1098
        %v1100 = vpop.f32.mrf.mxu0
        %1101 = vdwg.mxu0
        %1102 = vst [vmem:[%s295] sm:$0xff] %v1099
        %s1103 = sand.u32 %s142, 1
        %s1104 = scalar_lea.sflag [#allocation4], %s1103
        %s1105 = sand.u32 %s142, 1
        %s1106 = smul.addr %s1105, 8
        %s1107 = scalar_lea.vmem [#allocation10], %s1106
        // Predicated region
        $region57: #{tpu_custom_call.1} parent=39 // pred_check
          %p1108 = pneg %p152
        $region58: #{tpu_custom_call.1} parent=39 // pred_check_branch
          %1110 = sbr.rel (%p1108) target = $region60
        $region59: #{tpu_custom_call.1} parent=39 // pred_region
          %1112 = vsyncadd %s1104, 0
          %s1113 = smul.addr %s24, 8
          %s1114 = scalar_lea.hbm %s5, %s1113
          %s1116 = sshll.u32 %s1107, 4
          %s1117 = int_to_ptr.vmem [resolvable:$true] %s1116
          %s1118 = sshll.u32 %s1114, 4
          %s1119 = int_to_ptr.hbm [resolvable:$true] %s1118
          %1121 = dma.vmem_to_hbm [thread:$0]  %s1117, 128, %s1119, %s1104
        $region60: #{tpu_custom_call.1} parent=39 // pred_fallthru
          _
      $region40: #{tpu_custom_call.1} parent=5 // pred_fallthru
        _
      %p1122 = scmp.le.s32.totalorder 2, %s19
      // Predicated region
      $region61: #{tpu_custom_call.1} parent=5 // pred_check
        %p1123 = pneg %p1122
      $region62: #{tpu_custom_call.1} parent=5 // pred_check_branch
        %1125 = sbr.rel (%p1123) target = $region64
      $region63: #{tpu_custom_call.1} parent=5 // pred_region
        %s1126 = ssub.s32 %s19, 2
        // Predicated region
        $region65: #{tpu_custom_call.1} parent=63 // pred_check
          %p1127 = pneg %p158
        $region66: #{tpu_custom_call.1} parent=63 // pred_check_branch
          %1129 = sbr.rel (%p1127) target = $region68
        $region67: #{tpu_custom_call.1} parent=63 // pred_region
          %s1130 = sand.u32 %s143, 1
          %s1131 = scalar_lea.sflag [#allocation4], %s1130
          %s1132 = sand.u32 %s143, 1
          %s1133 = smul.addr %s1132, 8
          %s1134 = scalar_lea.vmem [#allocation10], %s1133
          %1136 = dma.done %s1131, 128
        $region68: #{tpu_custom_call.1} parent=63 // pred_fallthru
          _
      $region64: #{tpu_custom_call.1} parent=5 // pred_fallthru
        _
    $region6: #{tpu_custom_call.1} parent=1 // loop_footer
      %s23 = sadd.s32 1, %s19
    $region7: #{tpu_custom_call.1} parent=1 // loop_footer_branch
      %18 = sbr.rel target = $region3
    $region8: #{tpu_custom_call.1} parent=1 // loop_exit
      _
    %1137 = vsyncpa [#allocation3], 1
    %s1138 = scalar_lea.sflag [#allocation3], 1
    %1139 = vsyncpa %s1138, 1
    %1140 = vsyncpa [#allocation6], 1
    %1141 = vsyncpa [#allocation9], 1
    %1142 = vsyncpa [#allocation4], 1
    %s1143 = scalar_lea.sflag [#allocation4], 1
    %1144 = vsyncpa %s1143, 1

</llo_original>
